<compile_context>
chip_gen: v7x
topology: tpu7x:2x2x1
jax: 0.10.0
libtpu: 0.0.40
codegen_flags: <defaults>
</compile_context>

<pallas_src>
import jax
import jax.numpy as jnp
from jax.experimental import pallas as pl
from jax.experimental.pallas import tpu as pltpu


def _ce_per_sample_kernel(x_ref, t_ref, wy_ref, col_ref, per_ref):
    """per[i] = w_y[i] * (logsumexp(x[i, :]) - x[i, y[i]]) for one row tile."""
    x = x_ref[...].astype(jnp.float32)      # (tile_n, C) logits, upcast in-kernel
    t = t_ref[...]                          # (tile_n, 1) int32 targets
    wy = wy_ref[...]                        # (tile_n, 1) f32 weight[target]
    col = col_ref[...]                      # (1, C) int32 class ids (constant block)

    # numerically stable log-sum-exp along the class (lane) axis, f32
    m = jnp.max(x, axis=-1, keepdims=True)
    lse = m + jnp.log(jnp.sum(jnp.exp(x - m), axis=-1, keepdims=True))

    # one-hot gather of the target logit
    x_y = jnp.sum(jnp.where(col == t, x, 0.0), axis=-1, keepdims=True)

    per_ref[...] = wy * (lse - x_y)


def _round_up(a, b):
    return ((a + b - 1) // b) * b


def _vmem_capacity_bytes():
    try:
        return int(pltpu.get_tpu_info().vmem_capacity_bytes)
    except Exception:
        return 64 << 20  # conservative fallback: v7x per-TC VMEM


def _choose_tile_n(n, c, vmem_cap):
    """Row tile (multiple of 8), budgeted per chip generation."""
    if vmem_cap >= (100 << 20):         # v5e / v6e: 128 MiB VMEM
        f32_buf_bytes, max_rows = 12 << 20, 2048
    else:                               # v7x: 64 MiB per TC
        f32_buf_bytes, max_rows = 5 << 20, 1024
    rows_by_vmem = max(8, (f32_buf_bytes // max(1, c * 4)) // 8 * 8)
    rows = min(rows_by_vmem, max_rows, _round_up(n, 8))
    rows = max(8, rows // 8 * 8)
    # Prefer >= 2 grid steps so the "parallel" axis feeds both v7x TensorCores
    # (harmless on single-TC chips).
    if rows >= n and n > 8:
        rows = max(8, _round_up(-(-n // 2), 8))
    return rows


def _vmem_limit(tile_n, c, itemsize, vmem_cap):
    x_tile = tile_n * c * itemsize           # logits block, double-buffered
    f32_tile = tile_n * c * 4                # in-kernel f32 intermediates
    # (tile_n, 1) blocks occupy tile_n/8 vregs = tile_n*512 B in VMEM each
    # (vreg padding); 3 of them (targets, weights, output), double-buffered.
    side = 2 * 3 * tile_n * 512
    col = 2 * 8 * _round_up(c, 128) * 4      # (1, C) int32 block, vreg-padded
    need = 2 * x_tile + 3 * f32_tile + side + col + (2 << 20)
    cap = (96 << 20) if vmem_cap >= (100 << 20) else (44 << 20)
    return int(min(cap, max(16 << 20, need)))


def softmax_loss(inputs, target, weight, reduction="mean", tile_n=None):
    """CrossEntropyLoss(weight=weight, reduction=reduction)(inputs, target)."""
    N, C = inputs.shape
    x = inputs                                   # keep HBM dtype (bf16 ok)
    t = target.astype(jnp.int32)
    w = weight.astype(jnp.float32)

    w_y = w[t]                                   # hoisted class-weight gather, O(N)

    vmem_cap = _vmem_capacity_bytes()
    if tile_n is None:
        tile_n = _choose_tile_n(N, C, vmem_cap)
    tile_n = max(8, (tile_n // 8) * 8)

    n_tiles = pl.cdiv(N, tile_n)                 # ragged last tile handled by Pallas

    t2 = t.reshape(N, 1)
    wy2 = w_y.astype(jnp.float32).reshape(N, 1)
    col_ids = jnp.arange(C, dtype=jnp.int32).reshape(1, C)

    cost = pl.CostEstimate(
        flops=int(6 * N * C),
        transcendentals=int(N * C),
        bytes_accessed=int(N * C * x.dtype.itemsize + 12 * N + 4 * C),
    )

    per = pl.pallas_call(
        _ce_per_sample_kernel,
        out_shape=jax.ShapeDtypeStruct((N, 1), jnp.float32),
        grid_spec=pltpu.PrefetchScalarGridSpec(
            num_scalar_prefetch=0,
            grid=(n_tiles,),
            in_specs=[
                pl.BlockSpec((tile_n, C), lambda i: (i, 0)),   # logits tile
                pl.BlockSpec((tile_n, 1), lambda i: (i, 0)),   # targets
                pl.BlockSpec((tile_n, 1), lambda i: (i, 0)),   # weight[target]
                pl.BlockSpec((1, C), lambda i: (0, 0)),        # class ids (constant)
            ],
            out_specs=pl.BlockSpec((tile_n, 1), lambda i: (i, 0)),
        ),
        compiler_params=pltpu.CompilerParams(
            dimension_semantics=("parallel",),                 # no carried accumulator
            vmem_limit_bytes=_vmem_limit(tile_n, C, x.dtype.itemsize, vmem_cap),
        ),
        cost_estimate=cost,
    )(x, t2, wy2, col_ids)

    per = per[:, 0]
    if reduction == "none":
        return per
    loss_sum = jnp.sum(per)
    if reduction == "sum":
        return loss_sum
    if reduction == "mean":
        return loss_sum / jnp.sum(w_y)
    raise ValueError(f"unknown reduction: {reduction}")


def _reference(inputs, target, weight, reduction):
    # pure-JAX reference matching torch.nn.CrossEntropyLoss semantics
    x = inputs.astype(jnp.float32)
    logp = jax.nn.log_softmax(x, axis=-1)
    nll = -jnp.take_along_axis(logp, target[:, None].astype(jnp.int32), axis=-1)[:, 0]
    w_y = weight[target]
    per = w_y * nll
    if reduction == "mean":
        return jnp.sum(per) / jnp.sum(w_y)
    elif reduction == "sum":
        return jnp.sum(per)
    return per


if __name__ == "__main__":
    key = jax.random.PRNGKey(0)
    k1, k2 = jax.random.split(key)

    # N not a multiple of the tile size -> exercises the ragged-tile path.
    N, C = 19, 32
    inputs = jax.random.normal(k1, (N, C), dtype=jnp.float32)
    target = jax.random.randint(k2, (N,), 0, C, dtype=jnp.int32)
    # deterministic per-class weights (module __init__ takes `weight` of shape (C,))
    weight = jnp.linspace(0.5, 1.5, C, dtype=jnp.float32)

    for reduction in ("mean", "sum", "none"):
        out = softmax_loss(inputs, target, weight, reduction=reduction)
        out = jax.block_until_ready(out)
        ref = _reference(inputs, target, weight, reduction)
        assert jnp.allclose(out, ref, rtol=1e-5, atol=1e-5), (reduction, out, ref)

    print("KERNEL_OK")
</pallas_src>

<mosaic_0001>
module attributes {stable_mosaic.version = 11 : i64} {
  func.func @_ce_per_sample_kernel(%arg0: i32, %arg1: memref<16x32xf32, #tpu.memory_space<vmem>>, %arg2: memref<16x1xi32, #tpu.memory_space<vmem>>, %arg3: memref<16x1xf32, #tpu.memory_space<vmem>>, %arg4: memref<1x32xi32, #tpu.memory_space<vmem>>, %arg5: memref<16x1xf32, #tpu.memory_space<vmem>>) attributes {dimension_semantics = [#tpu.dimension_semantics<parallel>], iteration_bounds = array<i64: 2>, scalar_prefetch = 0 : i64, scratch_operands = 0 : i64, tpu.core_type = #tpu.core_type<tc>, window_params = [{transform_indices = @transform_0, window_bounds = array<i64: 16, 32>}, {transform_indices = @transform_1, window_bounds = array<i64: 16, 1>}, {transform_indices = @transform_2, window_bounds = array<i64: 16, 1>}, {pipeline_mode = #tpu.pipeline_mode<synchronous>, transform_indices = @transform_3, window_bounds = array<i64: 1, 32>}, {transform_indices = @transform_4, window_bounds = array<i64: 16, 1>}]} {
    %c0 = arith.constant 0 : index
    %c0_0 = arith.constant 0 : index
    %0 = vector.load %arg1[%c0, %c0_0] : memref<16x32xf32, #tpu.memory_space<vmem>>, vector<16x32xf32>
    %c0_1 = arith.constant 0 : index
    %c0_2 = arith.constant 0 : index
    %1 = vector.load %arg2[%c0_1, %c0_2] : memref<16x1xi32, #tpu.memory_space<vmem>>, vector<16x1xi32>
    %c0_3 = arith.constant 0 : index
    %c0_4 = arith.constant 0 : index
    %2 = vector.load %arg3[%c0_3, %c0_4] : memref<16x1xf32, #tpu.memory_space<vmem>>, vector<16x1xf32>
    %c0_5 = arith.constant 0 : index
    %c0_6 = arith.constant 0 : index
    %3 = vector.load %arg4[%c0_5, %c0_6] : memref<1x32xi32, #tpu.memory_space<vmem>>, vector<1x32xi32>
    %cst = arith.constant dense<0xFF800000> : vector<16xf32>
    %4 = vector.multi_reduction <maximumf>, %0, %cst [1] : vector<16x32xf32> to vector<16xf32>
    %5 = vector.shape_cast %4 : vector<16xf32> to vector<16x1xf32>
    %6 = vector.broadcast %5 : vector<16x1xf32> to vector<16x32xf32>
    %7 = arith.subf %0, %6 : vector<16x32xf32>
    %8 = math.exp %7 : vector<16x32xf32>
    %cst_7 = arith.constant dense<0.000000e+00> : vector<16xf32>
    %9 = vector.multi_reduction <add>, %8, %cst_7 [1] : vector<16x32xf32> to vector<16xf32>
    %10 = vector.shape_cast %9 : vector<16xf32> to vector<16x1xf32>
    %11 = math.log %10 : vector<16x1xf32>
    %12 = arith.addf %5, %11 : vector<16x1xf32>
    %13 = vector.broadcast %3 : vector<1x32xi32> to vector<16x32xi32>
    %14 = vector.broadcast %1 : vector<16x1xi32> to vector<16x32xi32>
    %15 = arith.cmpi eq, %13, %14 : vector<16x32xi32>
    %cst_8 = arith.constant 0.000000e+00 : f32
    %16 = vector.broadcast %cst_8 : f32 to vector<16x32xf32>
    %17 = arith.select %15, %0, %16 : vector<16x32xi1>, vector<16x32xf32>
    %cst_9 = arith.constant dense<0.000000e+00> : vector<16xf32>
    %18 = vector.multi_reduction <add>, %17, %cst_9 [1] : vector<16x32xf32> to vector<16xf32>
    %19 = vector.shape_cast %18 : vector<16xf32> to vector<16x1xf32>
    %20 = arith.subf %12, %19 : vector<16x1xf32>
    %21 = arith.mulf %2, %20 : vector<16x1xf32>
    %c0_10 = arith.constant 0 : index
    %c0_11 = arith.constant 0 : index
    %22 = vector.load %arg5[%c0_10, %c0_11] : memref<16x1xf32, #tpu.memory_space<vmem>>, vector<16x1xf32>
    tpu.vector_store %arg5[%c0_10, %c0_11], %21 {strides = array<i32>} : memref<16x1xf32, #tpu.memory_space<vmem>>, vector<16x1xf32>,
    return
  }
  func.func @transform_0(%arg0: i32) -> (i32, i32) {
    %c0_i32 = arith.constant 0 : i32
    %c0_i32_0 = arith.constant 0 : i32
    return %arg0, %c0_i32 : i32, i32
  }
  func.func @transform_1(%arg0: i32) -> (i32, i32) {
    %c0_i32 = arith.constant 0 : i32
    %c0_i32_0 = arith.constant 0 : i32
    return %arg0, %c0_i32 : i32, i32
  }
  func.func @transform_2(%arg0: i32) -> (i32, i32) {
    %c0_i32 = arith.constant 0 : i32
    %c0_i32_0 = arith.constant 0 : i32
    return %arg0, %c0_i32 : i32, i32
  }
  func.func @transform_3(%arg0: i32) -> (i32, i32) {
    %c0_i32 = arith.constant 0 : i32
    %c0_i32_0 = arith.constant 0 : i32
    %c0_i32_1 = arith.constant 0 : i32
    return %c0_i32, %c0_i32_0 : i32, i32
  }
  func.func @transform_4(%arg0: i32) -> (i32, i32) {
    %c0_i32 = arith.constant 0 : i32
    %c0_i32_0 = arith.constant 0 : i32
    return %arg0, %c0_i32 : i32, i32
  }
}

</mosaic_0001>

<llo_original>
// kernel: tpu_custom_call.1
$region0: #{tpu_custom_call.1}
  #allocation0 [shape = 'u32[]', space=smem, size = 0x4, offset = 0x4, fixed_abs, tag = 'smem constant byte address 0x4 - core index']
  #allocation1 [shape = 'u32[144,128]{1,0:T(1,128)}', space=vmem, size = 0x12000, scoped, tag = 'internal scratch']
  %s0 = inlined_call_operand.vmem [shape: f32[19,32], index: 0, kind: input, shape index: {}]
  %s1 = inlined_call_operand.vmem [shape: s32[19,1], index: 1, kind: input, shape index: {}]
  %s2 = inlined_call_operand.vmem [shape: f32[19,1], index: 2, kind: input, shape index: {}]
  %s3 = inlined_call_operand.vmem [shape: s32[1,32], index: 3, kind: input, shape index: {}]
  %s4 = inlined_call_operand.vmem [shape: f32[19,1], index: 4, kind: output, shape index: {}]
  %s5 = sld [smem:[#allocation0]]
  $region97: #{tpu_custom_call.1} parent=0
    _
  %s7 = ssub.s32 1, %s5
  %s8 = scalar_select 0, %s7, %s5
  $region1: #{tpu_custom_call.1} parent=0
    #allocation2 [shape = 'u8[16384]{0}', space=vmem, size = 0x4000, scoped, tag = 'output window, operand 0']
    loop: start=0, step=1, limit=4
    $region2: #{tpu_custom_call.1} parent=1 // loop_pre_header
      _
    $region3: #{tpu_custom_call.1} parent=1 // loop_header
      %s10 = sphi 0, %s14
      %p11 = scmp.ge.s32.totalorder %s10, 4
      %s20 = sphi 0, %s22
      %s23 = sphi 0, %s20
      %s24 = sphi 0, %s23
      %s40 = sphi 0, %s24
      %s46 = sphi 0, %s48
      %s49 = sphi 0, %s46
      %s50 = sphi 0, %s49
      %s66 = sphi 0, %s50
      %s72 = sphi 0, %s74
      %s75 = sphi 0, %s72
      %s76 = sphi 0, %s75
      %s92 = sphi 0, %s76
      %s96 = sphi 0, %s96
      %s98 = sphi 0, %s96
      %s99 = sphi 0, %s98
      %s113 = sphi 0, %s99
      %s119 = sphi 0, %s121
      %s122 = sphi 0, %s119
      %s123 = sphi 0, %s122
      %s139 = sphi 0, %s123
    $region4: #{tpu_custom_call.1} parent=1 // loop_header_branch
      %13 = sbr.rel (%p11) target = $region8
    $region5: #{tpu_custom_call.1} parent=1 // loop_body
      %s15 = ssub.s32 %s10, 1
      %s16 = ssub.s32 %s10, 2
      %s17 = sadd.s32 %s10, 1
      %s18 = ssub.s32 %s10, %s17
      %p19 = scmp.eq.s32.totalorder %s18, 0
      %s21 = sadd.s32 %s20, 1
      %s22 = scalar_select %p19, %s20, %s21
      %p25 = pneg %p19
      %p26 = scmp.eq.s32.totalorder %s10, 1
      %p27 = por %p25, %p26
      %p28 = scmp.ne.s32.totalorder %s20, %s23
      %p29 = scmp.eq.s32.totalorder %s10, 0
      %p30 = por %p28, %p29
      %p31 = scmp.ne.s32.totalorder %s20, %s23
      %p32 = scmp.eq.s32.totalorder %s15, 1
      %p33 = por %p31, %p32
      %p34 = scmp.ne.s32.totalorder %s23, %s24
      %p35 = scmp.eq.s32.totalorder %s15, 0
      %p36 = por %p34, %p35
      %p37 = scmp.ne.s32.totalorder %s23, %s24
      %p38 = scmp.eq.s32.totalorder %s16, 1
      %p39 = por %p37, %p38
      %p41 = scmp.ne.s32.totalorder %s24, %s40
      %p42 = scmp.eq.s32.totalorder %s16, 0
      %p43 = por %p41, %p42
      %s44 = ssub.s32 %s10, %s17
      %p45 = scmp.eq.s32.totalorder %s44, 0
      %s47 = sadd.s32 %s46, 1
      %s48 = scalar_select %p45, %s46, %s47
      %p51 = pneg %p45
      %p52 = scmp.eq.s32.totalorder %s10, 1
      %p53 = por %p51, %p52
      %p54 = scmp.ne.s32.totalorder %s46, %s49
      %p55 = scmp.eq.s32.totalorder %s10, 0
      %p56 = por %p54, %p55
      %p57 = scmp.ne.s32.totalorder %s46, %s49
      %p58 = scmp.eq.s32.totalorder %s15, 1
      %p59 = por %p57, %p58
      %p60 = scmp.ne.s32.totalorder %s49, %s50
      %p61 = scmp.eq.s32.totalorder %s15, 0
      %p62 = por %p60, %p61
      %p63 = scmp.ne.s32.totalorder %s49, %s50
      %p64 = scmp.eq.s32.totalorder %s16, 1
      %p65 = por %p63, %p64
      %p67 = scmp.ne.s32.totalorder %s50, %s66
      %p68 = scmp.eq.s32.totalorder %s16, 0
      %p69 = por %p67, %p68
      %s70 = ssub.s32 %s10, %s17
      %p71 = scmp.eq.s32.totalorder %s70, 0
      %s73 = sadd.s32 %s72, 1
      %s74 = scalar_select %p71, %s72, %s73
      %p77 = pneg %p71
      %p78 = scmp.eq.s32.totalorder %s10, 1
      %p79 = por %p77, %p78
      %p80 = scmp.ne.s32.totalorder %s72, %s75
      %p81 = scmp.eq.s32.totalorder %s10, 0
      %p82 = por %p80, %p81
      %p83 = scmp.ne.s32.totalorder %s72, %s75
      %p84 = scmp.eq.s32.totalorder %s15, 1
      %p85 = por %p83, %p84
      %p86 = scmp.ne.s32.totalorder %s75, %s76
      %p87 = scmp.eq.s32.totalorder %s15, 0
      %p88 = por %p86, %p87
      %p89 = scmp.ne.s32.totalorder %s75, %s76
      %p90 = scmp.eq.s32.totalorder %s16, 1
      %p91 = por %p89, %p90
      %p93 = scmp.ne.s32.totalorder %s76, %s92
      %p94 = scmp.eq.s32.totalorder %s16, 0
      %p95 = por %p93, %p94
      %s97 = sadd.s32 %s96, 1
      %p100 = scmp.eq.s32.totalorder %s10, 1
      %p101 = scmp.ne.s32.totalorder %s96, %s98
      %p102 = scmp.eq.s32.totalorder %s10, 0
      %p103 = por %p101, %p102
      %p104 = scmp.ne.s32.totalorder %s96, %s98
      %p105 = scmp.eq.s32.totalorder %s15, 1
      %p106 = por %p104, %p105
      %p107 = scmp.ne.s32.totalorder %s98, %s99
      %p108 = scmp.eq.s32.totalorder %s15, 0
      %p109 = por %p107, %p108
      %p110 = scmp.ne.s32.totalorder %s98, %s99
      %p111 = scmp.eq.s32.totalorder %s16, 1
      %p112 = por %p110, %p111
      %p114 = scmp.ne.s32.totalorder %s99, %s113
      %p115 = scmp.eq.s32.totalorder %s16, 0
      %p116 = por %p114, %p115
      %s117 = ssub.s32 %s10, %s17
      %p118 = scmp.eq.s32.totalorder %s117, 0
      %s120 = sadd.s32 %s119, 1
      %s121 = scalar_select %p118, %s119, %s120
      %p124 = pneg %p118
      %p125 = scmp.eq.s32.totalorder %s10, 1
      %p126 = por %p124, %p125
      %p127 = scmp.ne.s32.totalorder %s119, %s122
      %p128 = scmp.eq.s32.totalorder %s10, 0
      %p129 = por %p127, %p128
      %p130 = scmp.ne.s32.totalorder %s119, %s122
      %p131 = scmp.eq.s32.totalorder %s15, 1
      %p132 = por %p130, %p131
      %p133 = scmp.ne.s32.totalorder %s122, %s123
      %p134 = scmp.eq.s32.totalorder %s15, 0
      %p135 = por %p133, %p134
      %p136 = scmp.ne.s32.totalorder %s122, %s123
      %p137 = scmp.eq.s32.totalorder %s16, 1
      %p138 = por %p136, %p137
      %p140 = scmp.ne.s32.totalorder %s123, %s139
      %p141 = scmp.eq.s32.totalorder %s16, 0
      %p142 = por %p140, %p141
      %p143 = scmp.le.s32.totalorder 1, %s10
      %p144 = scmp.lt.s32.totalorder %s10, 3
      %p145 = pnand %p143, %p144
      %p146 = pneg %p145
      // Predicated region
      $region9: #{tpu_custom_call.1} parent=5 // pred_check
        _
      $region10: #{tpu_custom_call.1} parent=5 // pred_check_branch
        %148 = sbr.rel (%p145) target = $region12
      $region11: #{tpu_custom_call.1} parent=5 // pred_region
        %s149 = ssub.s32 %s10, 1
        // Predicated region
        $region13: #{tpu_custom_call.1} parent=11 // pred_check
          %p150 = pneg %p109
        $region14: #{tpu_custom_call.1} parent=11 // pred_check_branch
          %152 = sbr.rel (%p150) target = $region16
        $region15: #{tpu_custom_call.1} parent=11 // pred_region
          _
        $region16: #{tpu_custom_call.1} parent=11 // pred_fallthru
          _
      $region12: #{tpu_custom_call.1} parent=5 // pred_fallthru
        _
      %p153 = scmp.lt.s32.totalorder %s10, 2
      // Predicated region
      $region17: #{tpu_custom_call.1} parent=5 // pred_check
        %p154 = pneg %p153
      $region18: #{tpu_custom_call.1} parent=5 // pred_check_branch
        %156 = sbr.rel (%p154) target = $region20
      $region19: #{tpu_custom_call.1} parent=5 // pred_region
        // Predicated region
        $region21: #{tpu_custom_call.1} parent=19 // pred_check
          %p157 = pneg %p30
        $region22: #{tpu_custom_call.1} parent=19 // pred_check_branch
          %159 = sbr.rel (%p157) target = $region24
        $region23: #{tpu_custom_call.1} parent=19 // pred_region
          %s160 = smul.u32 2, %s10
          %s161 = ssub.s32 3, %s160
          %p162 = scmp.lt.s32.totalorder %s161, 2
          %s163 = scalar_select %p162, %s161, 2
          %s164 = smul.u32 128, %s163
          %p165 = scmp.lt.s32.totalorder %s160, 2
          %s166 = scalar_select %p165, %s160, 2
          %s167 = smul.addr %s166, 8
          %s168 = scalar_lea.vmem %s0, %s167
          %s169 = smul.u32 2, %s10
          %s170 = ssub.s32 3, %s169
          %p171 = scmp.lt.s32.totalorder %s170, 2
          %s172 = scalar_select %p171, %s170, 2
          %s173 = smul.u32 128, %s172
        $region24: #{tpu_custom_call.1} parent=19 // pred_fallthru
          _
        // Predicated region
        $region25: #{tpu_custom_call.1} parent=19 // pred_check
          %p174 = pneg %p56
        $region26: #{tpu_custom_call.1} parent=19 // pred_check_branch
          %176 = sbr.rel (%p174) target = $region28
        $region27: #{tpu_custom_call.1} parent=19 // pred_region
          %s177 = smul.u32 2, %s10
          %s178 = ssub.s32 3, %s177
          %p179 = scmp.lt.s32.totalorder %s178, 2
          %s180 = scalar_select %p179, %s178, 2
          %s181 = smul.u32 128, %s180
          %p182 = scmp.lt.s32.totalorder %s177, 2
          %s183 = scalar_select %p182, %s177, 2
          %s184 = smul.addr %s183, 8
          %s185 = scalar_lea.vmem %s1, %s184
          %s186 = smul.u32 2, %s10
          %s187 = ssub.s32 3, %s186
          %p188 = scmp.lt.s32.totalorder %s187, 2
          %s189 = scalar_select %p188, %s187, 2
          %s190 = smul.u32 128, %s189
        $region28: #{tpu_custom_call.1} parent=19 // pred_fallthru
          _
        // Predicated region
        $region29: #{tpu_custom_call.1} parent=19 // pred_check
          %p191 = pneg %p82
        $region30: #{tpu_custom_call.1} parent=19 // pred_check_branch
          %193 = sbr.rel (%p191) target = $region32
        $region31: #{tpu_custom_call.1} parent=19 // pred_region
          %s194 = smul.u32 2, %s10
          %s195 = ssub.s32 3, %s194
          %p196 = scmp.lt.s32.totalorder %s195, 2
          %s197 = scalar_select %p196, %s195, 2
          %s198 = smul.u32 128, %s197
          %p199 = scmp.lt.s32.totalorder %s194, 2
          %s200 = scalar_select %p199, %s194, 2
          %s201 = smul.addr %s200, 8
          %s202 = scalar_lea.vmem %s2, %s201
          %s203 = smul.u32 2, %s10
          %s204 = ssub.s32 3, %s203
          %p205 = scmp.lt.s32.totalorder %s204, 2
          %s206 = scalar_select %p205, %s204, 2
          %s207 = smul.u32 128, %s206
        $region32: #{tpu_custom_call.1} parent=19 // pred_fallthru
          _
      $region20: #{tpu_custom_call.1} parent=5 // pred_fallthru
        _
      %p208 = scmp.le.s32.totalorder 1, %s10
      %p209 = scmp.lt.s32.totalorder %s10, 3
      %p210 = pnand %p208, %p209
      %p211 = pneg %p210
      // Predicated region
      $region33: #{tpu_custom_call.1} parent=5 // pred_check
        _
      $region34: #{tpu_custom_call.1} parent=5 // pred_check_branch
        %213 = sbr.rel (%p210) target = $region36
      $region35: #{tpu_custom_call.1} parent=5 // pred_region
        %s214 = ssub.s32 %s10, 1
        %s215 = smul.u32 2, %s15
        %s216 = ssub.s32 3, %s215
        %p217 = scmp.lt.s32.totalorder %s216, 2
        %s218 = scalar_select %p217, %s216, 2
        %s219 = smul.u32 128, %s218
        %p220 = scmp.lt.s32.totalorder %s215, 2
        %s221 = scalar_select %p220, %s215, 2
        %s222 = smul.addr %s221, 8
        %s223 = scalar_lea.vmem %s0, %s222
        %p224 = pneg %p36
        %p225 = pneg %p33
        %s226 = smul.u32 2, %s15
        %s227 = ssub.s32 3, %s226
        %p228 = scmp.lt.s32.totalorder %s227, 2
        %s229 = scalar_select %p228, %s227, 2
        %s230 = smul.u32 128, %s229
        %p231 = scmp.lt.s32.totalorder %s226, 2
        %s232 = scalar_select %p231, %s226, 2
        %s233 = smul.addr %s232, 8
        %s234 = scalar_lea.vmem %s1, %s233
        %p235 = pneg %p62
        %p236 = pneg %p59
        %s237 = smul.u32 2, %s15
        %s238 = ssub.s32 3, %s237
        %p239 = scmp.lt.s32.totalorder %s238, 2
        %s240 = scalar_select %p239, %s238, 2
        %s241 = smul.u32 128, %s240
        %p242 = scmp.lt.s32.totalorder %s237, 2
        %s243 = scalar_select %p242, %s237, 2
        %s244 = smul.addr %s243, 8
        %s245 = scalar_lea.vmem %s2, %s244
        %p246 = pneg %p88
        %p247 = pneg %p85
        %p248 = pneg %p109
        %p249 = pneg %p106
        %p250 = pneg %p135
        %p251 = pneg %p132
        %s252 = sand.u32 %s122, 1
        %s253 = sand.u32 %s122, 1
        %s254 = smul.addr %s253, 16
        %s255 = scalar_lea.vmem [#allocation2], %s254
        %s256 = smul.u32 2, %s15
        %s257 = ssub.s32 3, %s256
        %p258 = scmp.lt.s32.totalorder %s257, 2
        %s259 = scalar_select %p258, %s257, 2
        %s260 = smul.u32 128, %s259
        %p261 = scmp.lt.s32.totalorder %s256, 2
        %s262 = scalar_select %p261, %s256, 2
        %s263 = smul.addr %s262, 8
        %s264 = scalar_lea.vmem %s0, %s263
        %s265 = smul.u32 2, %s15
        %s266 = ssub.s32 3, %s265
        %p267 = scmp.lt.s32.totalorder %s266, 2
        %s268 = scalar_select %p267, %s266, 2
        %s269 = smul.u32 128, %s268
        %s270 = smul.u32 2, %s15
        %s271 = ssub.s32 3, %s270
        %p272 = scmp.lt.s32.totalorder %s271, 2
        %s273 = scalar_select %p272, %s271, 2
        %s274 = smul.u32 128, %s273
        %p275 = scmp.lt.s32.totalorder %s270, 2
        %s276 = scalar_select %p275, %s270, 2
        %s277 = smul.addr %s276, 8
        %s278 = scalar_lea.vmem %s1, %s277
        %s279 = smul.u32 2, %s15
        %s280 = ssub.s32 3, %s279
        %p281 = scmp.lt.s32.totalorder %s280, 2
        %s282 = scalar_select %p281, %s280, 2
        %s283 = smul.u32 128, %s282
        %s284 = smul.u32 2, %s15
        %s285 = ssub.s32 3, %s284
        %p286 = scmp.lt.s32.totalorder %s285, 2
        %s287 = scalar_select %p286, %s285, 2
        %s288 = smul.u32 128, %s287
        %p289 = scmp.lt.s32.totalorder %s284, 2
        %s290 = scalar_select %p289, %s284, 2
        %s291 = smul.addr %s290, 8
        %s292 = scalar_lea.vmem %s2, %s291
        %s293 = smul.u32 2, %s15
        %s294 = ssub.s32 3, %s293
        %p295 = scmp.lt.s32.totalorder %s294, 2
        %s296 = scalar_select %p295, %s294, 2
        %s297 = smul.u32 128, %s296
        %s298 = smul.u32 2, %s15
        %s299 = ssub.s32 3, %s298
        %p300 = scmp.lt.s32.totalorder %s299, 2
        %s301 = scalar_select %p300, %s299, 2
        %s302 = smul.u32 128, %s301
        %v303 = vld [vmem:[%s264] sm:$0xff]
        %v304 = vld [vmem:[%s264 + $0x8] sm:$0xff]
        %v305 = vld [vmem:[%s278] sm:$0xff]
        %v306 = vld [vmem:[%s278 + $0x8] sm:$0xff]
        %v307 = vld [vmem:[%s292] sm:$0xff]
        %v308 = vld [vmem:[%s292 + $0x8] sm:$0xff]
        %v309 = vld [vmem:[%s3] sm:$0x1]
        %vm310 = vcmask 261120
        %v311 = vsel %vm310, %v303, -inf
        %312 = vmax.xlane.f32.xlu0 %v311
        %v313 = vpop.xlane.xlu0 %312
        %v314 = vsel %vm310, %v304, -inf
        %315 = vmax.xlane.f32.xlu0 %v314
        %v316 = vpop.xlane.xlu0 %315
        %v317 = vsub.f32 %v303, %v313
        %v318 = vsub.f32 %v304, %v316
        %v319 = vmul.f32 %v317, 1.442695
        %v320 = vpow.pop %v319
        %v321 = vmul.f32 %v318, 1.442695
        %v322 = vpow.pop %v321
        %v323 = vsel %vm310, %v320, 0.0
        %324 = vadd.xlane.f32.xlu0 %v323
        %v325 = vpop.xlane.xlu0 %324
        %v326 = vsel %vm310, %v322, 0.0
        %327 = vadd.xlane.f32.xlu0 %v326
        %v328 = vpop.xlane.xlu0 %327
        %v329 = vlog2.pop %v325
        %v330 = vmul.f32 %v329, 0.6931472
        %v331 = vlog2.pop %v328
        %v332 = vmul.f32 %v331, 0.6931472
        %v333 = vadd.f32 %v313, %v330
        %v334 = vadd.f32 %v316, %v332
        %v335 = vlaneseq
        %v336 = vshrl.u32 %v335, 7
        %v337 = vsub.s32 0, %v336
        %v338 = vrot.slane %v309, %v337
        %339 = vset.pattern.permute.xlu0 0
        %340 = vperm.xlu0 %339, %v305
        %v341 = vpop.permute.xlu0 %340
        %342 = vset.pattern.permute.xlu0 0
        %343 = vperm.xlu0 %342, %v306
        %v344 = vpop.permute.xlu0 %343
        %vm345 = vcmp.eq.s32.totalorder %v338, %v341
        %vm346 = vcmp.eq.s32.totalorder %v338, %v344
        %v347 = vsel %vm345, %v303, 0.0
        %v348 = vsel %vm346, %v304, 0.0
        %v349 = vsel %vm310, %v347, 0.0
        %350 = vadd.xlane.f32.xlu0 %v349
        %v351 = vpop.xlane.xlu0 %350
        %v352 = vsel %vm310, %v348, 0.0
        %353 = vadd.xlane.f32.xlu0 %v352
        %v354 = vpop.xlane.xlu0 %353
        %v355 = vsub.f32 %v333, %v351
        %v356 = vsub.f32 %v334, %v354
        %v357 = vmul.f32 %v307, %v355
        %v358 = vmul.f32 %v308, %v356
        %vm359 = vcmask 7168
        %360 = vst.msk [vmem:[%s255] sm:$0xff] %vm359, %v357
        %361 = vst.msk [vmem:[%s255 + $0x8] sm:$0xff] %vm359, %v358
        %s362 = sand.u32 %s122, 1
        %s363 = sand.u32 %s122, 1
        %s364 = smul.addr %s363, 16
        %s365 = scalar_lea.vmem [#allocation2], %s364
        // Predicated region
        $region37: #{tpu_custom_call.1} parent=35 // pred_check
          %p366 = pneg %p132
        $region38: #{tpu_custom_call.1} parent=35 // pred_check_branch
          %368 = sbr.rel (%p366) target = $region40
        $region39: #{tpu_custom_call.1} parent=35 // pred_region
          %s369 = smul.u32 2, %s15
          %s370 = ssub.s32 3, %s369
          %p371 = scmp.lt.s32.totalorder %s370, 2
          %s372 = scalar_select %p371, %s370, 2
          %s373 = smul.u32 128, %s372
          %p374 = scmp.ne.s32.totalorder 0, %s373
          %s375 = smul.addr %s369, 8
          %s376 = scalar_lea.vmem %s4, %s375
          // Predicated region
          $region41: #{tpu_custom_call.1} parent=39 // pred_check
            %p377 = pneg %p374
          $region42: #{tpu_custom_call.1} parent=39 // pred_check_branch
            %379 = sbr.rel (%p377) target = $region44
          $region43: #{tpu_custom_call.1} parent=39 // pred_region
            // Predicated region
            $region45: #{tpu_custom_call.1} parent=43 // pred_check
              _
            $region46: #{tpu_custom_call.1} parent=43 // pred_check_branch
              %381 = sbr.rel (0) target = $region48
            $region47: #{tpu_custom_call.1} parent=43 // pred_region
              // Predicated region
              $region67: #{tpu_custom_call.1} parent=47 // pred_check
                _
              $region68: #{tpu_custom_call.1} parent=47 // pred_check_branch
                %432 = sbr.rel (0) target = $region70
              $region69: #{tpu_custom_call.1} parent=47 // pred_region
                %s433 = sshrl.u32 %s372, 1
                // While loop
                $region71: #{tpu_custom_call.1} parent=69 // loop_pre_header
                  _
                $region72: #{tpu_custom_call.1} parent=69 // loop_header
                  %s435 = sphi 0, %s437
                  %p436 = scmp.ge.s32.totalorder %s435, %s433
                  %s440 = sphi 0, %s449
                  %s441 = sphi %s365, %s452
                  %s442 = sphi %s376, %s453
                $region73: #{tpu_custom_call.1} parent=69 // loop_header_branch
                  %439 = sbr.rel (%p436) target = $region77
                $region74: #{tpu_custom_call.1} parent=69 // loop_body
                  %v443 = vld [vmem:[%s441] sm:$0xff]
                  %444 = vst [vmem:[%s442] sm:$0xff] %v443
                  %v445 = vld [vmem:[%s441 + $0x8] sm:$0xff]
                  %446 = vst [vmem:[%s442 + $0x8] sm:$0xff] %v445
                  %s447 = sadd.s32 1, %s440
                  %p448 = scmp.ge.s32.totalorder %s447, %s433
                  %s449 = scalar_select %p448, 0, %s447
                  %s450 = smul.u32 %s449, 16
                  %s451 = smul.u32 %s449, 16
                  %s452 = scalar_lea.vmem %s365, %s450 [#allocation2]
                  %s453 = scalar_lea.vmem %s376, %s451
                $region75: #{tpu_custom_call.1} parent=69 // loop_footer
                  %s437 = sadd.s32 %s435, 1
                $region76: #{tpu_custom_call.1} parent=69 // loop_footer_branch
                  %434 = sbr.rel target = $region72
                $region77: #{tpu_custom_call.1} parent=69 // loop_exit
                  _
                %s454 = sshrl.u32 %s372, 1
                %s455 = sand.u32 %s372, 1
                %s456 = smul.u32 %s454, 2
                %s457 = smul.u32 8, %s456
                %s458 = scalar_lea.vmem %s365, %s457 [#allocation2]
                %s459 = smul.u32 8, %s456
                %s460 = scalar_lea.vmem %s376, %s459
                // While loop
                $region78: #{tpu_custom_call.1} parent=69 // loop_pre_header
                  _
                $region79: #{tpu_custom_call.1} parent=69 // loop_header
                  %s462 = sphi 0, %s464
                  %p463 = scmp.ge.s32.totalorder %s462, %s455
                  %s467 = sphi 0, %s474
                  %s468 = sphi %s458, %s477
                  %s469 = sphi %s460, %s478
                $region80: #{tpu_custom_call.1} parent=69 // loop_header_branch
                  %466 = sbr.rel (%p463) target = $region84
                $region81: #{tpu_custom_call.1} parent=69 // loop_body
                  %v470 = vld [vmem:[%s468] sm:$0xff]
                  %471 = vst [vmem:[%s469] sm:$0xff] %v470
                  %s472 = sadd.s32 1, %s467
                  %p473 = scmp.ge.s32.totalorder %s472, %s455
                  %s474 = scalar_select %p473, 0, %s472
                  %s475 = smul.u32 %s474, 8
                  %s476 = smul.u32 %s474, 8
                  %s477 = scalar_lea.vmem %s458, %s475 [#allocation2]
                  %s478 = scalar_lea.vmem %s460, %s476
                $region82: #{tpu_custom_call.1} parent=69 // loop_footer
                  %s464 = sadd.s32 %s462, 1
                $region83: #{tpu_custom_call.1} parent=69 // loop_footer_branch
                  %461 = sbr.rel target = $region79
                $region84: #{tpu_custom_call.1} parent=69 // loop_exit
                  _
              $region70: #{tpu_custom_call.1} parent=47 // pred_fallthru
                _
              // Predicated region
              $region85: #{tpu_custom_call.1} parent=47 // pred_check
                _
              $region86: #{tpu_custom_call.1} parent=47 // pred_check_branch
                %480 = sbr.rel target = $region88
              $region87: #{tpu_custom_call.1} parent=47 // pred_region
                _
              $region88: #{tpu_custom_call.1} parent=47 // pred_fallthru
                _
            $region48: #{tpu_custom_call.1} parent=43 // pred_fallthru
              _
            // Predicated region
            $region49: #{tpu_custom_call.1} parent=43 // pred_check
              _
            $region50: #{tpu_custom_call.1} parent=43 // pred_check_branch
              %383 = sbr.rel target = $region52
            $region51: #{tpu_custom_call.1} parent=43 // pred_region
              %s385 = sshrl.u32 %s372, 1
              // While loop
              $region53: #{tpu_custom_call.1} parent=51 // loop_pre_header
                _
              $region54: #{tpu_custom_call.1} parent=51 // loop_header
                %s387 = sphi 0, %s389
                %p388 = scmp.ge.s32.totalorder %s387, %s385
                %s392 = sphi 0, %s401
                %s393 = sphi %s365, %s404
                %s394 = sphi %s376, %s405
              $region55: #{tpu_custom_call.1} parent=51 // loop_header_branch
                %391 = sbr.rel (%p388) target = $region59
              $region56: #{tpu_custom_call.1} parent=51 // loop_body
                %v395 = vld [vmem:[%s393] sm:$0xff]
                %396 = vst [vmem:[%s394] sm:$0xff] %v395
                %v397 = vld [vmem:[%s393 + $0x8] sm:$0xff]
                %398 = vst [vmem:[%s394 + $0x8] sm:$0xff] %v397
                %s399 = sadd.s32 1, %s392
                %p400 = scmp.ge.s32.totalorder %s399, %s385
                %s401 = scalar_select %p400, 0, %s399
                %s402 = smul.u32 %s401, 16
                %s403 = smul.u32 %s401, 16
                %s404 = scalar_lea.vmem %s365, %s402 [#allocation2]
                %s405 = scalar_lea.vmem %s376, %s403
              $region57: #{tpu_custom_call.1} parent=51 // loop_footer
                %s389 = sadd.s32 %s387, 1
              $region58: #{tpu_custom_call.1} parent=51 // loop_footer_branch
                %386 = sbr.rel target = $region54
              $region59: #{tpu_custom_call.1} parent=51 // loop_exit
                _
              %s406 = sshrl.u32 %s372, 1
              %s407 = sand.u32 %s372, 1
              %s408 = smul.u32 %s406, 2
              %s409 = smul.u32 8, %s408
              %s410 = scalar_lea.vmem %s365, %s409 [#allocation2]
              %s411 = smul.u32 8, %s408
              %s412 = scalar_lea.vmem %s376, %s411
              // While loop
              $region60: #{tpu_custom_call.1} parent=51 // loop_pre_header
                _
              $region61: #{tpu_custom_call.1} parent=51 // loop_header
                %s414 = sphi 0, %s416
                %p415 = scmp.ge.s32.totalorder %s414, %s407
                %s419 = sphi 0, %s426
                %s420 = sphi %s410, %s429
                %s421 = sphi %s412, %s430
              $region62: #{tpu_custom_call.1} parent=51 // loop_header_branch
                %418 = sbr.rel (%p415) target = $region66
              $region63: #{tpu_custom_call.1} parent=51 // loop_body
                %v422 = vld [vmem:[%s420] sm:$0xff]
                %423 = vst [vmem:[%s421] sm:$0xff] %v422
                %s424 = sadd.s32 1, %s419
                %p425 = scmp.ge.s32.totalorder %s424, %s407
                %s426 = scalar_select %p425, 0, %s424
                %s427 = smul.u32 %s426, 8
                %s428 = smul.u32 %s426, 8
                %s429 = scalar_lea.vmem %s410, %s427 [#allocation2]
                %s430 = scalar_lea.vmem %s412, %s428
              $region64: #{tpu_custom_call.1} parent=51 // loop_footer
                %s416 = sadd.s32 %s414, 1
              $region65: #{tpu_custom_call.1} parent=51 // loop_footer_branch
                %413 = sbr.rel target = $region61
              $region66: #{tpu_custom_call.1} parent=51 // loop_exit
                _
            $region52: #{tpu_custom_call.1} parent=43 // pred_fallthru
              _
          $region44: #{tpu_custom_call.1} parent=39 // pred_fallthru
            _
          %481 = vnop
        $region40: #{tpu_custom_call.1} parent=35 // pred_fallthru
          _
      $region36: #{tpu_custom_call.1} parent=5 // pred_fallthru
        _
      %p482 = scmp.le.s32.totalorder 2, %s10
      // Predicated region
      $region89: #{tpu_custom_call.1} parent=5 // pred_check
        %p483 = pneg %p482
      $region90: #{tpu_custom_call.1} parent=5 // pred_check_branch
        %485 = sbr.rel (%p483) target = $region92
      $region91: #{tpu_custom_call.1} parent=5 // pred_region
        %s486 = ssub.s32 %s10, 2
        // Predicated region
        $region93: #{tpu_custom_call.1} parent=91 // pred_check
          %p487 = pneg %p138
        $region94: #{tpu_custom_call.1} parent=91 // pred_check_branch
          %489 = sbr.rel (%p487) target = $region96
        $region95: #{tpu_custom_call.1} parent=91 // pred_region
          %s490 = sand.u32 %s123, 1
          %s491 = sand.u32 %s123, 1
          %s492 = smul.addr %s491, 16
          %s493 = scalar_lea.vmem [#allocation2], %s492
        $region96: #{tpu_custom_call.1} parent=91 // pred_fallthru
          _
      $region92: #{tpu_custom_call.1} parent=5 // pred_fallthru
        _
    $region6: #{tpu_custom_call.1} parent=1 // loop_footer
      %s14 = sadd.s32 1, %s10
    $region7: #{tpu_custom_call.1} parent=1 // loop_footer_branch
      %9 = sbr.rel target = $region3
    $region8: #{tpu_custom_call.1} parent=1 // loop_exit
      _

</llo_original>
